<compile_context>
chip_gen: v5e
topology: v5e:2x2
jax: 0.10.0
libtpu: 0.0.40
codegen_flags: <defaults>
</compile_context>

<pallas_src>
import functools
import math

import jax
import jax.numpy as jnp
import numpy as np
from jax.experimental import pallas as pl
from jax.experimental.pallas import tpu as pltpu


def _round_up(n, m):
    return ((n + m - 1) // m) * m


def _padded_block_bytes(shape, dtype):
    """VMEM bytes for one buffer of `shape`, accounting for (sublane,128) lane tiling."""
    isize = jnp.dtype(dtype).itemsize
    sub = max(8, 32 // isize)  # f32 -> 8, bf16 -> 16, int8/fp8 -> 32 sublanes per tile
    dims = tuple(int(d) for d in shape)
    if len(dims) == 0:
        return isize
    if len(dims) == 1:
        return _round_up(dims[0], 128) * isize
    lead = 1
    for d in dims[:-2]:
        lead *= d
    return lead * _round_up(dims[-2], sub) * _round_up(dims[-1], 128) * isize


def _vmem_capacity_bytes():
    try:
        info = pltpu.get_tpu_info()
        cap = int(getattr(info, "vmem_capacity_bytes", 0) or 0)
        if cap > 0:
            return cap
    except Exception:
        pass
    return 64 * 2 ** 20  # conservative default (v7x per-TensorCore VMEM)


def _token_embedding_kernel(x_ref, halo_ref, w_ref, o_ref, *, fuse_taps, compute_dtype):
    """One (TB, TL) x (TH) tile of the circular conv.

    x_ref:    (TB, TL, C)       current sequence tile
    halo_ref: (TB, 1, 2, C)     wrap rows: [:,0,0,:]=x[(t0-1)%L], [:,0,1,:]=x[(t0+TL)%L]
    w_ref:    (3*C, TH) if fuse_taps else (3, C, TH)
    o_ref:    (TB, TL, TH)
    """
    tb, tl, c = x_ref.shape
    xt = x_ref[...]
    halo = halo_ref[...]                         # (TB, 1, 2, C)
    prev_edge = halo[:, 0, 0, :][:, None, :]     # (TB, 1, C) = x[t0-1]
    next_edge = halo[:, 0, 1, :][:, None, :]     # (TB, 1, C) = x[t0+TL]

    # Circular-shifted copies within this L tile (halo supplies the wrap rows).
    # Shifts run on the un-cast input dtype; the compute_dtype cast happens after.
    x_prev = jnp.concatenate([prev_edge, xt[:, : tl - 1, :]], axis=1)  # row t -> x[t-1]
    x_next = jnp.concatenate([xt[:, 1:, :], next_edge], axis=1)        # row t -> x[t+1]

    cast = (lambda a: a) if compute_dtype is None else (lambda a: a.astype(compute_dtype))
    m = tb * tl
    if fuse_taps:
        lhs = jnp.concatenate([cast(x_prev), cast(xt), cast(x_next)], axis=-1)
        acc = jnp.dot(lhs.reshape(m, 3 * c), w_ref[...],
                      preferred_element_type=jnp.float32)
    else:
        acc = jnp.dot(cast(x_prev).reshape(m, c), w_ref[0],
                      preferred_element_type=jnp.float32)
        acc = acc + jnp.dot(cast(xt).reshape(m, c), w_ref[1],
                            preferred_element_type=jnp.float32)
        acc = acc + jnp.dot(cast(x_next).reshape(m, c), w_ref[2],
                            preferred_element_type=jnp.float32)

    # f32 accumulation; cast only at the final store (out_dtype may be bf16).
    o_ref[...] = acc.reshape(o_ref.shape).astype(o_ref.dtype)


def prepare_token_embedding_weight(weight):
    """Hoisted relayout (do once at model init).

    weight: (H, C_in, 3) PyTorch Conv1d layout -> (3, C_in, H_pad), H_pad multiple of 128.
    """
    h = weight.shape[0]
    h_pad = _round_up(h, 128)
    w = jnp.transpose(weight, (2, 1, 0))  # (3, C_in, H)
    if h_pad != h:
        w = jnp.pad(w, ((0, 0), (0, 0), (0, h_pad - h)))
    return w


def token_embedding(x, w_prepared, h_out, *, compute_dtype=None, out_dtype=None,
                    fuse_taps=None):
    """x: (B, L, C_in); w_prepared: (3, C_in, H_pad) from prepare_token_embedding_weight."""
    B, L, c_in = x.shape
    assert w_prepared.shape[0] == 3 and w_prepared.shape[1] == c_in
    h_pad = w_prepared.shape[2]
    assert h_pad >= h_out and h_pad % 128 == 0

    out_dtype = x.dtype if out_dtype is None else jnp.dtype(out_dtype)
    w_dtype = w_prepared.dtype if compute_dtype is None else jnp.dtype(compute_dtype)
    if compute_dtype is not None:
        # Only the (small) weights are pre-cast; x keeps its HBM dtype so the in-kernel
        # shifts/concats operate on unpacked rows and the cast lands right before the MXU.
        w_prepared = w_prepared.astype(w_dtype)

    if fuse_taps is None:
        # MXU pads K to its native depth, so a single K=3*C_in dot beats three K=C_in dots
        # whenever C_in is small (the typical token-embedding case).
        fuse_taps = (3 * c_in) <= 512

    cap = _vmem_capacity_bytes()
    budget = int(cap * 0.8)  # headroom for compiler scratch (v7x ~51 MiB, v5e/v6e ~102 MiB)

    th_cands = [t for t in (512, 256, 128) if t <= h_pad]
    tb_cands = [t for t in (16, 8, 4, 2, 1) if B % t == 0]
    tl_cands = [L] + [t for t in (2048, 1024, 512, 256, 128, 64, 32, 16, 8)
                      if t < L and L % t == 0]

    def need_bytes(tb, tl, th):
        cd = w_dtype
        n = 2 * _padded_block_bytes((tb, tl, c_in), x.dtype)        # x block (double-buffered)
        n += 2 * _padded_block_bytes((tb, 1, 2, c_in), x.dtype)     # halo block
        if fuse_taps:
            n += 2 * _padded_block_bytes((3 * c_in, th), w_dtype)   # weight block
        else:
            n += 2 * 3 * _padded_block_bytes((c_in, th), w_dtype)
        n += 2 * _padded_block_bytes((tb, tl, th), out_dtype)       # output block
        # in-kernel temporaries: shifted copies, fused lhs, f32 accumulator
        n += 2 * _padded_block_bytes((tb, tl, c_in), x.dtype)
        if fuse_taps:
            n += _padded_block_bytes((tb * tl, 3 * c_in), cd)
        else:
            n += 3 * _padded_block_bytes((tb * tl, c_in), cd)
        n += _padded_block_bytes((tb * tl, th), jnp.float32)
        return n

    best = None
    for tl_c in tl_cands:
        for tb_c in tb_cands:
            for th_c in th_cands:
                req = need_bytes(tb_c, tl_c, th_c)
                if req <= budget:
                    score = (tb_c * tl_c * th_c, th_c, tl_c)
                    if best is None or score > best[0]:
                        best = (score, tb_c, tl_c, th_c, req)
    if best is None:  # degenerate fallback: smallest tiles
        tb, tl, th = 1, tl_cands[-1], 128
        block_bytes = need_bytes(tb, tl, th)
    else:
        _, tb, tl, th, block_bytes = best

    nb_grid = B // tb
    nl = L // tl
    nh = pl.cdiv(h_out, th)

    # Pad (or trim) the weight width to exactly the tiled extent; masked stores keep the
    # HBM output at h_out columns, so no post-call slice is needed.
    w_width = nh * th
    if w_width > h_pad:
        w_prepared = jnp.pad(w_prepared, ((0, 0), (0, 0), (0, w_width - h_pad)))
    elif w_width < h_pad:
        w_prepared = w_prepared[:, :, :w_width]

    # Tiny per-L-tile halo with the circular wrap rows (2 rows per tile per batch).
    starts = np.arange(nl) * tl
    prev_rows = x[:, (starts - 1) % L, :]             # (B, nL, C)
    next_rows = x[:, (starts + tl) % L, :]            # (B, nL, C)
    halo = jnp.stack([prev_rows, next_rows], axis=2)  # (B, nL, 2, C)

    if fuse_taps:
        w_in = w_prepared.reshape(3 * c_in, w_width)
        w_spec = pl.BlockSpec((3 * c_in, th), lambda b, h, l: (0, h))
    else:
        w_in = w_prepared
        w_spec = pl.BlockSpec((3, c_in, th), lambda b, h, l: (0, 0, h))

    # L innermost: the weight block index is constant across the L sweep -> stays resident.
    grid = (nb_grid, nh, nl)

    x_isize = jnp.dtype(x.dtype).itemsize
    w_isize = jnp.dtype(w_dtype).itemsize
    out_isize = jnp.dtype(out_dtype).itemsize
    cost = pl.CostEstimate(
        flops=2 * B * L * 3 * c_in * w_width,
        transcendentals=0,
        bytes_accessed=int(nh * B * L * c_in * x_isize
                           + nb_grid * 3 * c_in * w_width * w_isize
                           + B * L * h_out * out_isize),
    )

    vmem_limit = int(min(int(cap * 0.9), max(budget, block_bytes + (4 << 20))))

    out = pl.pallas_call(
        functools.partial(
            _token_embedding_kernel, fuse_taps=fuse_taps,
            compute_dtype=None if compute_dtype is None else jnp.dtype(compute_dtype)),
        out_shape=jax.ShapeDtypeStruct((B, L, h_out), out_dtype),
        grid_spec=pltpu.PrefetchScalarGridSpec(
            num_scalar_prefetch=0,
            grid=grid,
            in_specs=[
                pl.BlockSpec((tb, tl, c_in), lambda b, h, l: (b, l, 0)),
                pl.BlockSpec((tb, 1, 2, c_in), lambda b, h, l: (b, l, 0, 0)),
                w_spec,
            ],
            out_specs=pl.BlockSpec((tb, tl, th), lambda b, h, l: (b, l, h)),
        ),
        compiler_params=pltpu.CompilerParams(
            dimension_semantics=("parallel", "parallel", "parallel"),
            vmem_limit_bytes=vmem_limit,
        ),
        cost_estimate=cost,
    )(x, halo, w_in)
    return out


def reference_forward(x, weight):
    """Independent reference: explicit circular pad + lax conv (NCH layout)."""
    xc = jnp.transpose(x, (0, 2, 1))                                  # (B, C_in, L)
    xp = jnp.concatenate([xc[:, :, -1:], xc, xc[:, :, :1]], axis=-1)  # circular pad 1
    out = jax.lax.conv_general_dilated(
        xp, weight, window_strides=(1,), padding="VALID",
        dimension_numbers=("NCH", "OIH", "NCH"))
    return jnp.transpose(out, (0, 2, 1))                              # (B, L, H)


if __name__ == "__main__":
    def run_case(B, L, C_in, H, seed, **kw):
        key = jax.random.PRNGKey(seed)
        kx, kwt = jax.random.split(key)
        # Deterministic kaiming_normal_(mode='fan_in', nonlinearity='leaky_relu') init.
        fan_in = C_in * 3
        gain = math.sqrt(2.0 / (1.0 + 0.01 ** 2))
        std = gain / math.sqrt(fan_in)
        weight = std * jax.random.normal(kwt, (H, C_in, 3), dtype=jnp.float32)
        x = jax.random.normal(kx, (B, L, C_in), dtype=jnp.float32)
        w_prep = prepare_token_embedding_weight(weight)   # hoisted relayout (model init)
        out = jax.block_until_ready(token_embedding(x, w_prep, H, **kw))
        ref = reference_forward(x, weight)
        return out, ref

    # Primary small config (fused single-matmul path, f32 in/out).
    out, ref = run_case(2, 8, 4, 32, 0)
    assert out.shape == (2, 8, 32) and out.dtype == jnp.float32
    assert jnp.allclose(out, ref, atol=1e-5, rtol=1e-5), (
        f"max abs err = {jnp.max(jnp.abs(out - ref))}")

    # Non-fused (3-dot, large-C_in) path on the same shapes.
    out2, ref2 = run_case(2, 8, 4, 32, 0, fuse_taps=False)
    assert jnp.allclose(out2, ref2, atol=1e-5, rtol=1e-5), (
        f"max abs err (3-dot) = {jnp.max(jnp.abs(out2 - ref2))}")

    # bf16 MXU operands + bf16 HBM stores, f32 accumulation in-kernel.
    out3, ref3 = run_case(2, 8, 4, 32, 0,
                          compute_dtype=jnp.bfloat16, out_dtype=jnp.bfloat16)
    assert out3.dtype == jnp.bfloat16
    assert jnp.allclose(out3.astype(jnp.float32), ref3, atol=5e-2, rtol=5e-2), (
        f"bf16 max abs err = {jnp.max(jnp.abs(out3.astype(jnp.float32) - ref3))}")

    # Literal shapes from the PyTorch spec: x = (1, 10, 1), hidden_size = 4.
    out4, ref4 = run_case(1, 10, 1, 4, 1)
    assert out4.shape == (1, 10, 4)
    assert jnp.allclose(out4, ref4, atol=1e-5, rtol=1e-5), (
        f"spec-shape max abs err = {jnp.max(jnp.abs(out4 - ref4))}")

    print("KERNEL_OK")
</pallas_src>

<mosaic_0001>
module attributes {stable_mosaic.version = 11 : i64} {
  func.func @_token_embedding_kernel(%arg0: i32, %arg1: i32, %arg2: i32, %arg3: memref<2x8x4xf32, #tpu.memory_space<vmem>>, %arg4: memref<2x1x2x4xf32, #tpu.memory_space<vmem>>, %arg5: memref<12x128xf32, #tpu.memory_space<vmem>>, %arg6: memref<2x8x128xf32, #tpu.memory_space<vmem>>) attributes {dimension_semantics = [#tpu.dimension_semantics<parallel>, #tpu.dimension_semantics<parallel>, #tpu.dimension_semantics<parallel>], iteration_bounds = array<i64: 1, 1, 1>, scalar_prefetch = 0 : i64, scratch_operands = 0 : i64, tpu.core_type = #tpu.core_type<tc>, window_params = [{transform_indices = @transform_0, window_bounds = array<i64: 2, 8, 4>}, {transform_indices = @transform_1, window_bounds = array<i64: 2, 1, 2, 4>}, {transform_indices = @transform_2, window_bounds = array<i64: 12, 128>}, {transform_indices = @transform_3, window_bounds = array<i64: 2, 8, 128>}]} {
    %c0 = arith.constant 0 : index
    %c0_0 = arith.constant 0 : index
    %c0_1 = arith.constant 0 : index
    %0 = vector.load %arg3[%c0, %c0_0, %c0_1] : memref<2x8x4xf32, #tpu.memory_space<vmem>>, vector<2x8x4xf32>
    %c0_2 = arith.constant 0 : index
    %c0_3 = arith.constant 0 : index
    %c0_4 = arith.constant 0 : index
    %c0_5 = arith.constant 0 : index
    %1 = vector.load %arg4[%c0_2, %c0_3, %c0_4, %c0_5] : memref<2x1x2x4xf32, #tpu.memory_space<vmem>>, vector<2x1x2x4xf32>
    %2 = vector.extract_strided_slice %1 {offsets = [0, 0, 0, 0], sizes = [2, 1, 1, 4], strides = [1, 1, 1, 1]} : vector<2x1x2x4xf32> to vector<2x1x1x4xf32>
    %3 = vector.shape_cast %2 : vector<2x1x1x4xf32> to vector<2x4xf32>
    %4 = vector.shape_cast %3 : vector<2x4xf32> to vector<2x1x4xf32>
    %5 = vector.extract_strided_slice %1 {offsets = [0, 0, 1, 0], sizes = [2, 1, 1, 4], strides = [1, 1, 1, 1]} : vector<2x1x2x4xf32> to vector<2x1x1x4xf32>
    %6 = vector.shape_cast %5 : vector<2x1x1x4xf32> to vector<2x4xf32>
    %7 = vector.shape_cast %6 : vector<2x4xf32> to vector<2x1x4xf32>
    %8 = vector.extract_strided_slice %0 {offsets = [0, 0, 0], sizes = [2, 7, 4], strides = [1, 1, 1]} : vector<2x8x4xf32> to vector<2x7x4xf32>
    %9 = tpu.concatenate %4, %8 in 1 : vector<2x1x4xf32>, vector<2x7x4xf32> -> vector<2x8x4xf32>
    %10 = vector.extract_strided_slice %0 {offsets = [0, 1, 0], sizes = [2, 7, 4], strides = [1, 1, 1]} : vector<2x8x4xf32> to vector<2x7x4xf32>
    %11 = tpu.concatenate %10, %7 in 1 : vector<2x7x4xf32>, vector<2x1x4xf32> -> vector<2x8x4xf32>
    %12 = tpu.concatenate %9, %0, %11 in 2 : vector<2x8x4xf32>, vector<2x8x4xf32>, vector<2x8x4xf32> -> vector<2x8x12xf32>
    %13 = vector.shape_cast %12 : vector<2x8x12xf32> to vector<16x12xf32>
    %c0_6 = arith.constant 0 : index
    %c0_7 = arith.constant 0 : index
    %14 = vector.load %arg5[%c0_6, %c0_7] : memref<12x128xf32, #tpu.memory_space<vmem>>, vector<12x128xf32>
    %cst = arith.constant dense<0.000000e+00> : vector<16x128xf32>
    %15 = tpu.matmul %13, %14, %cst {dimension_numbers = #tpu.dot_dimension_numbers<[1], [0], [0], [1], [0, 0, 1, 1], [], []>} : vector<16x12xf32>, vector<12x128xf32>, vector<16x128xf32> -> vector<16x128xf32>
    %16 = vector.shape_cast %15 : vector<16x128xf32> to vector<2x8x128xf32>
    %c0_8 = arith.constant 0 : index
    %c0_9 = arith.constant 0 : index
    %c0_10 = arith.constant 0 : index
    %17 = vector.load %arg6[%c0_8, %c0_9, %c0_10] : memref<2x8x128xf32, #tpu.memory_space<vmem>>, vector<2x8x128xf32>
    tpu.vector_store %arg6[%c0_8, %c0_9, %c0_10], %16 {strides = array<i32>} : memref<2x8x128xf32, #tpu.memory_space<vmem>>, vector<2x8x128xf32>,
    return
  }
  func.func @transform_0(%arg0: i32, %arg1: i32, %arg2: i32) -> (i32, i32, i32) {
    %c0_i32 = arith.constant 0 : i32
    %c0_i32_0 = arith.constant 0 : i32
    return %arg0, %arg2, %c0_i32 : i32, i32, i32
  }
  func.func @transform_1(%arg0: i32, %arg1: i32, %arg2: i32) -> (i32, i32, i32, i32) {
    %c0_i32 = arith.constant 0 : i32
    %c0_i32_0 = arith.constant 0 : i32
    %c0_i32_1 = arith.constant 0 : i32
    return %arg0, %arg2, %c0_i32, %c0_i32_0 : i32, i32, i32, i32
  }
  func.func @transform_2(%arg0: i32, %arg1: i32, %arg2: i32) -> (i32, i32) {
    %c0_i32 = arith.constant 0 : i32
    %c0_i32_0 = arith.constant 0 : i32
    return %c0_i32, %arg1 : i32, i32
  }
  func.func @transform_3(%arg0: i32, %arg1: i32, %arg2: i32) -> (i32, i32, i32) {
    %c0_i32 = arith.constant 0 : i32
    return %arg0, %arg2, %arg1 : i32, i32, i32
  }
}

</mosaic_0001>

<llo_original>
// kernel: tpu_custom_call.1
$region0: #{tpu_custom_call.1}
  #allocation0 [shape = 'u32[]', space=smem, size = 0x4, offset = 0x4, fixed_abs, tag = 'smem constant byte address 0x4 - core index']
  #allocation1 [shape = 'u32[72,128]{1,0:T(1,128)}', space=vmem, size = 0x9000, scoped, tag = 'internal scratch']
  %s0 = inlined_call_operand.vmem [shape: f32[2,8,4], index: 0, kind: input, shape index: {}]
  %s1 = inlined_call_operand.vmem [shape: f32[2,1,2,4], index: 1, kind: input, shape index: {}]
  %s2 = inlined_call_operand.vmem [shape: f32[12,128], index: 2, kind: input, shape index: {}]
  %s3 = inlined_call_operand.hbm [shape: f32[2,8,32], index: 3, kind: output, shape index: {}]
  %s4 = sld [smem:[#allocation0]]
  $region22: #{tpu_custom_call.1} parent=0
    _
  %s6 = ssub.s32 1, %s4
  %s7 = scalar_select 0, %s6, %s4
  $region1: #{tpu_custom_call.1} parent=0
    #allocation2 [shape = 'u8[8192]{0}', space=vmem, size = 0x2000, scoped, tag = 'output window, operand 0, single buffered']
    #allocation3 [shape = 's32[1]{0}', space=sflag, size = 0x4, scoped, tag = 'scoped memory for tpu_custom_call.1']
    %8 = vsyncpa [#allocation3], 0
    // Predicated region
    $region2: #{tpu_custom_call.1} parent=1 // pred_check
      _
    $region3: #{tpu_custom_call.1} parent=1 // pred_check_branch
      %10 = sbr.rel (0) target = $region5
    $region4: #{tpu_custom_call.1} parent=1 // pred_region
      _
    $region5: #{tpu_custom_call.1} parent=1 // pred_fallthru
      _
    // Predicated region
    $region6: #{tpu_custom_call.1} parent=1 // pred_check
      _
    $region7: #{tpu_custom_call.1} parent=1 // pred_check_branch
      %12 = sbr.rel (0) target = $region9
    $region8: #{tpu_custom_call.1} parent=1 // pred_region
      _
    $region9: #{tpu_custom_call.1} parent=1 // pred_fallthru
      _
    // Predicated region
    $region10: #{tpu_custom_call.1} parent=1 // pred_check
      _
    $region11: #{tpu_custom_call.1} parent=1 // pred_check_branch
      %14 = sbr.rel (0) target = $region13
    $region12: #{tpu_custom_call.1} parent=1 // pred_region
      _
    $region13: #{tpu_custom_call.1} parent=1 // pred_fallthru
      _
    %v15 = vld [vmem:[%s0] sm:$0xff]
    %v16 = vld [vmem:[%s0 + $0x8] sm:$0xff]
    %v17 = vld [vmem:[%s1] sm:$0x3]
    %v18 = vld [vmem:[%s1 + $0x2] sm:$0x3]
    %v21 = vrot.slane %v15, 7
    %v22 = vrot.slane %v16, 7
    %vm25 = vcmask 1040384
    %v26 = vsel %vm25, %v17, %v21
    %v27 = vsel %vm25, %v18, %v22
    %v28 = vrot.slane %v15, 1
    %v29 = vrot.slane %v16, 1
    %v34 = vrot.slane %v17, 2
    %v35 = vrot.slane %v18, 2
    %vm38 = vcmask 1046528
    %v39 = vsel %vm38, %v28, %v34
    %v40 = vsel %vm38, %v29, %v35
    %41 = vrot.lane.b32.xlu0 %v15, 4
    %v42 = vpop.permute.xlu0 %41
    %43 = vrot.lane.b32.xlu0 %v16, 4
    %v44 = vpop.permute.xlu0 %43
    %49 = vrot.lane.b32.xlu0 %v39, 8
    %v50 = vpop.permute.xlu0 %49
    %51 = vrot.lane.b32.xlu0 %v40, 8
    %v52 = vpop.permute.xlu0 %51
    %vm55 = vcmask 31744
    %v56 = vsel %vm55, %v26, %v42
    %v57 = vsel %vm55, %v27, %v44
    %vm58 = vcmask 64512
    %v59 = vsel %vm58, %v56, %v50
    %v60 = vsel %vm58, %v57, %v52
    %v61 = vld [vmem:[%s2] sm:$0xff]
    %v62 = vld [vmem:[%s2 + $0x8] sm:$0xf]
    %vm63 = vcmask 97280
    %v65 = vsel %vm63, %v59, 0
    %v68 = vsel %vm63, %v60, 0
    %vm70 = vcmask 1043456
    %v72 = vsel %vm70, %v62, 0
    %74 = vmatpush.msra.mxu0 0.0
    %75 = vmatpush.msra.mxu0 0.0
    %76 = vmatpush.msra.mxu0 0.0
    %77 = vmatpush.msra.mxu0 0.0
    %78 = vmatpush.msra.mxu0 0.0
    %79 = vmatpush.msra.mxu0 0.0
    %80 = vmatpush.msra.mxu0 0.0
    %81 = vmatpush.msra.mxu0 0.0
    %82 = vmatpush.msra.mxu0 0.0
    %83 = vmatpush.msra.mxu0 0.0
    %84 = vmatpush.msra.mxu0 0.0
    %85 = vmatpush.msra.mxu0 0.0
    %86 = vmatpush.msra.mxu0 0.0
    %87 = vmatpush.msra.mxu0 0.0
    %88 = vmatpush.msra.mxu0 %v72
    %89 = vmatpush.msra.mxu0 %v61
    %90 = vmatmul.f32.gmra.mxu0 %v65
    %v91 = vpop.f32.mrf.mxu0
    %v92 = vadd.f32 0.0, %v91
    %93 = vmatmul.f32.gmra.mxu0 %v68
    %v94 = vpop.f32.mrf.mxu0
    %v95 = vadd.f32 0.0, %v94
    %96 = vdwg.mxu0
    %97 = vst [vmem:[#allocation2] sm:$0xff] %v92
    %98 = vst [vmem:[#allocation2 + $0x8] sm:$0xff] %v95
    // Predicated region
    $region14: #{tpu_custom_call.1} parent=1 // pred_check
      _
    $region15: #{tpu_custom_call.1} parent=1 // pred_check_branch
      %100 = sbr.rel (0) target = $region17
    $region16: #{tpu_custom_call.1} parent=1 // pred_region
      %102 = vsyncadd [#allocation3], 0
      %s103 = sshll.u32 [#allocation2], 4
      %s104 = int_to_ptr.vmem [resolvable:$true] %s103
      %s105 = sshll.u32 %s3, 4
      %s106 = int_to_ptr.hbm [resolvable:$true] %s105
      %111 = dma.vmem_to_hbm [thread:$0]  %s104, 256, %s106, [#allocation3], 128, 128, 8
    $region17: #{tpu_custom_call.1} parent=1 // pred_fallthru
      _
    // Predicated region
    $region18: #{tpu_custom_call.1} parent=1 // pred_check
      _
    $region19: #{tpu_custom_call.1} parent=1 // pred_check_branch
      %113 = sbr.rel (0) target = $region21
    $region20: #{tpu_custom_call.1} parent=1 // pred_region
      %115 = dma.done [#allocation3], 256
    $region21: #{tpu_custom_call.1} parent=1 // pred_fallthru
      _
    %116 = vsyncpa [#allocation3], 1

</llo_original>
